<compile_context>
chip_gen: v6e
topology: v6e:2x2x1
jax: 0.10.0
libtpu: 0.0.40
codegen_flags: <defaults>
</compile_context>

<pallas_src>
import functools

import jax
import jax.numpy as jnp
from jax.experimental import pallas as pl
from jax.experimental.pallas import tpu as pltpu


def _mh_linear_kernel(*refs, has_bias):
    """Grid: (head, m_tile, n_tile, k_tile); K is the reduction axis (last)."""
    if has_bias:
        x_ref, w_ref, b_ref, o_ref, acc_ref = refs
    else:
        x_ref, w_ref, o_ref, acc_ref = refs
        b_ref = None

    k = pl.program_id(3)

    @pl.when(k == 0)
    def _init():
        acc_ref[...] = jnp.zeros_like(acc_ref)

    # MXU matmul, f32 accumulation regardless of input dtype.
    acc_ref[...] += jnp.dot(
        x_ref[...], w_ref[...], preferred_element_type=jnp.float32
    )

    @pl.when(k == pl.num_programs(3) - 1)
    def _finalize():
        out = acc_ref[...]
        if b_ref is not None:
            out = out + b_ref[...].astype(jnp.float32)  # (1, tn) broadcasts
        o_ref[...] = out.astype(o_ref.dtype)


def _choose_tile(dim, max_tile):
    """Return (tile, padded_dim). Full extent if small, else aligned max_tile."""
    if dim <= max_tile:
        return dim, dim
    padded = ((dim + max_tile - 1) // max_tile) * max_tile
    return max_tile, padded


def _pad_axis(arr, axis, new_size):
    cur = arr.shape[axis]
    if cur == new_size:
        return arr
    widths = [(0, 0)] * arr.ndim
    widths[axis] = (0, new_size - cur)
    return jnp.pad(arr, widths)


def multihead_linear(x, weight, bias=None, *, tm_max=256, tk_max=512, tn_max=512):
    """Pallas implementation of MultiheadLinear.forward.

    x:      (B, I)  or  (B, H, I)
    weight: (O, I, H)
    bias:   (1, H, O) or None
    returns (B, H, O)
    """
    O, I, H = weight.shape

    if x.ndim == 2:
        if x.shape[1] != I:
            raise ValueError(f"Expected input features {I}, got {x.shape[1]}")
        three_d = False
        B = x.shape[0]
    elif x.ndim == 3:
        if x.shape[1] != H:
            raise ValueError(
                f"Expected input shape[1] to be {H} but got {x.shape[1]}")
        if x.shape[2] != I:
            raise ValueError(f"Expected input features {I}, got {x.shape[2]}")
        three_d = True
        B = x.shape[0]
    else:
        raise ValueError(
            "Input must be 2D batch x features or 3D batch x num_heads x features")

    M, K, N = B, I, O
    tm, Mp = _choose_tile(M, tm_max)   # sublane dim: full extent or mult of 8
    tk, Kp = _choose_tile(K, tk_max)   # mult of 128 when tiled
    tn, Np = _choose_tile(N, tn_max)   # lane dim: full extent or mult of 128

    # Weight: (O, I, H) -> (H, K, N), zero-pad K/N (zero padding keeps sums exact).
    w_t = jnp.transpose(weight, (2, 1, 0))
    w_t = _pad_axis(_pad_axis(w_t, 1, Kp), 2, Np)

    if three_d:
        # (B, H, K) -> (H, M, K): head becomes the (squeezed) leading block dim
        # so the block's last-two dims (tm, tk) stay layout-friendly.
        x_in = jnp.transpose(x, (1, 0, 2))
        x_in = _pad_axis(_pad_axis(x_in, 1, Mp), 2, Kp)
        x_spec = pl.BlockSpec((None, tm, tk), lambda h, i, j, k: (h, i, k))
    else:
        # (M, K): every head reads the same x tile (no replication in HBM).
        x_in = _pad_axis(_pad_axis(x, 0, Mp), 1, Kp)
        x_spec = pl.BlockSpec((tm, tk), lambda h, i, j, k: (i, k))

    in_specs = [
        x_spec,
        pl.BlockSpec((None, tk, tn), lambda h, i, j, k: (h, k, j)),
    ]
    inputs = [x_in, w_t]

    has_bias = bias is not None
    if has_bias:
        b = bias.reshape(H, 1, N)
        b = _pad_axis(b, 2, Np)
        in_specs.append(pl.BlockSpec((None, 1, tn), lambda h, i, j, k: (h, 0, j)))
        inputs.append(b)

    grid = (H, Mp // tm, Np // tn, Kp // tk)
    out_spec = pl.BlockSpec((None, tm, tn), lambda h, i, j, k: (h, i, j))
    out_shape = jax.ShapeDtypeStruct((H, Mp, Np), x.dtype)

    itemsize = x.dtype.itemsize
    # Double-buffered input/output tiles + f32 accumulator, plus headroom.
    vmem_est = (
        2 * (tm * tk + tk * tn + (tn if has_bias else 0)) * itemsize
        + 2 * tm * tn * itemsize
        + tm * tn * 4
    )
    vmem_limit = int(min(max(2 * vmem_est + (4 << 20), 8 << 20), 32 << 20))

    cost = pl.CostEstimate(
        flops=2 * H * M * K * N,
        transcendentals=0,
        bytes_accessed=int(
            x_in.size * itemsize
            + w_t.size * itemsize
            + (N * H * itemsize if has_bias else 0)
            + H * M * N * itemsize
        ),
    )

    kernel = functools.partial(_mh_linear_kernel, has_bias=has_bias)

    out = pl.pallas_call(
        kernel,
        out_shape=out_shape,
        grid_spec=pltpu.PrefetchScalarGridSpec(
            num_scalar_prefetch=0,
            grid=grid,
            in_specs=in_specs,
            out_specs=out_spec,
            scratch_shapes=[pltpu.VMEM((tm, tn), jnp.float32)],
        ),
        compiler_params=pltpu.CompilerParams(
            dimension_semantics=("parallel", "parallel", "parallel", "arbitrary"),
            vmem_limit_bytes=vmem_limit,
        ),
        cost_estimate=cost,
    )(*inputs)

    out = out[:, :M, :N]                # strip zero padding
    return jnp.transpose(out, (1, 0, 2))  # (H, B, O) -> (B, H, O)


if __name__ == "__main__":
    key = jax.random.PRNGKey(0)
    k_w, k_b, k_x3, k_x2 = jax.random.split(key, 4)

    B, H, I, O = 2, 4, 32, 32
    # Module init: weight ~ N(0, in_features**-0.5); bias exercised with
    # non-zero values so the bias-add path is actually checked.
    weight = jax.random.normal(k_w, (O, I, H), dtype=jnp.float32) * (I ** -0.5)
    bias = jax.random.normal(k_b, (1, H, O), dtype=jnp.float32) * 0.1
    x3 = jax.random.normal(k_x3, (B, H, I), dtype=jnp.float32)
    x2 = jax.random.normal(k_x2, (B, I), dtype=jnp.float32)

    # 3-D path ('bhi,oih->bho')
    out3 = jax.block_until_ready(multihead_linear(x3, weight, bias))
    ref3 = jnp.einsum("bhi,oih->bho", x3, weight,
                      precision=jax.lax.Precision.HIGHEST) + bias
    assert out3.shape == ref3.shape, (out3.shape, ref3.shape)
    assert jnp.allclose(out3, ref3, atol=2e-2, rtol=2e-2)

    # 2-D path ('bi,oih->bho')
    out2 = jax.block_until_ready(multihead_linear(x2, weight, bias))
    ref2 = jnp.einsum("bi,oih->bho", x2, weight,
                      precision=jax.lax.Precision.HIGHEST) + bias
    assert out2.shape == ref2.shape, (out2.shape, ref2.shape)
    assert jnp.allclose(out2, ref2, atol=2e-2, rtol=2e-2)

    # bias=None path
    out_nb = jax.block_until_ready(multihead_linear(x3, weight, None))
    ref_nb = jnp.einsum("bhi,oih->bho", x3, weight,
                        precision=jax.lax.Precision.HIGHEST)
    assert jnp.allclose(out_nb, ref_nb, atol=2e-2, rtol=2e-2)

    print("KERNEL_OK")
</pallas_src>

<mosaic_0001>
module attributes {stable_mosaic.version = 11 : i64} {
  func.func @_mh_linear_kernel(%arg0: i32, %arg1: i32, %arg2: i32, %arg3: i32, %arg4: memref<1x2x32xf32, #tpu.memory_space<vmem>>, %arg5: memref<1x32x32xf32, #tpu.memory_space<vmem>>, %arg6: memref<1x1x32xf32, #tpu.memory_space<vmem>>, %arg7: memref<1x2x32xf32, #tpu.memory_space<vmem>>, %arg8: memref<2x32xf32, #tpu.memory_space<vmem>>) attributes {dimension_semantics = [#tpu.dimension_semantics<parallel>, #tpu.dimension_semantics<parallel>, #tpu.dimension_semantics<parallel>, #tpu.dimension_semantics<arbitrary>], iteration_bounds = array<i64: 4, 1, 1, 1>, scalar_prefetch = 0 : i64, scratch_operands = 1 : i64, tpu.core_type = #tpu.core_type<tc>, window_params = [{transform_indices = @transform_0, window_bounds = array<i64: 1, 2, 32>}, {transform_indices = @transform_1, window_bounds = array<i64: 1, 32, 32>}, {transform_indices = @transform_2, window_bounds = array<i64: 1, 1, 32>}, {transform_indices = @transform_3, window_bounds = array<i64: 1, 2, 32>}]} {
    %c0_i32 = arith.constant 0 : i32
    %0 = arith.cmpi eq, %arg3, %c0_i32 : i32
    %1 = arith.extui %0 : i1 to i32
    %c0_i32_0 = arith.constant 0 : i32
    %2 = arith.cmpi ne, %1, %c0_i32_0 : i32
    scf.if %2 {
      %cst_12 = arith.constant 0.000000e+00 : f32
      %14 = vector.broadcast %cst_12 : f32 to vector<2x32xf32>
      %c0_13 = arith.constant 0 : index
      %c0_14 = arith.constant 0 : index
      %15 = vector.load %arg8[%c0_13, %c0_14] : memref<2x32xf32, #tpu.memory_space<vmem>>, vector<2x32xf32>
      tpu.vector_store %arg8[%c0_13, %c0_14], %14 {strides = array<i32>} : memref<2x32xf32, #tpu.memory_space<vmem>>, vector<2x32xf32>,
    } else {
    }
    %c0 = arith.constant 0 : index
    %c0_1 = arith.constant 0 : index
    %3 = vector.load %arg8[%c0, %c0_1] : memref<2x32xf32, #tpu.memory_space<vmem>>, vector<2x32xf32>
    %c0_2 = arith.constant 0 : index
    %c0_3 = arith.constant 0 : index
    %c0_4 = arith.constant 0 : index
    %4 = vector.load %arg4[%c0_2, %c0_3, %c0_4] : memref<1x2x32xf32, #tpu.memory_space<vmem>>, vector<1x2x32xf32>
    %5 = vector.shape_cast %4 : vector<1x2x32xf32> to vector<2x32xf32>
    %c0_5 = arith.constant 0 : index
    %c0_6 = arith.constant 0 : index
    %c0_7 = arith.constant 0 : index
    %6 = vector.load %arg5[%c0_5, %c0_6, %c0_7] : memref<1x32x32xf32, #tpu.memory_space<vmem>>, vector<1x32x32xf32>
    %7 = vector.shape_cast %6 : vector<1x32x32xf32> to vector<32x32xf32>
    %cst = arith.constant dense<0.000000e+00> : vector<2x32xf32>
    %8 = tpu.matmul %5, %7, %cst {dimension_numbers = #tpu.dot_dimension_numbers<[1], [0], [0], [1], [0, 0, 1, 1], [], []>} : vector<2x32xf32>, vector<32x32xf32>, vector<2x32xf32> -> vector<2x32xf32>
    %9 = arith.addf %3, %8 : vector<2x32xf32>
    %c0_8 = arith.constant 0 : index
    %c0_9 = arith.constant 0 : index
    %10 = vector.load %arg8[%c0_8, %c0_9] : memref<2x32xf32, #tpu.memory_space<vmem>>, vector<2x32xf32>
    tpu.vector_store %arg8[%c0_8, %c0_9], %9 {strides = array<i32>} : memref<2x32xf32, #tpu.memory_space<vmem>>, vector<2x32xf32>,
    %c0_i32_10 = arith.constant 0 : i32
    %11 = arith.cmpi eq, %arg3, %c0_i32_10 : i32
    %12 = arith.extui %11 : i1 to i32
    %c0_i32_11 = arith.constant 0 : i32
    %13 = arith.cmpi ne, %12, %c0_i32_11 : i32
    scf.if %13 {
      %c0_12 = arith.constant 0 : index
      %c0_13 = arith.constant 0 : index
      %14 = vector.load %arg8[%c0_12, %c0_13] : memref<2x32xf32, #tpu.memory_space<vmem>>, vector<2x32xf32>
      %c0_14 = arith.constant 0 : index
      %c0_15 = arith.constant 0 : index
      %c0_16 = arith.constant 0 : index
      %15 = vector.load %arg6[%c0_14, %c0_15, %c0_16] : memref<1x1x32xf32, #tpu.memory_space<vmem>>, vector<1x1x32xf32>
      %16 = vector.shape_cast %15 : vector<1x1x32xf32> to vector<1x32xf32>
      %17 = vector.broadcast %16 : vector<1x32xf32> to vector<2x32xf32>
      %18 = arith.addf %14, %17 : vector<2x32xf32>
      %c0_17 = arith.constant 0 : index
      %c0_18 = arith.constant 0 : index
      %c0_19 = arith.constant 0 : index
      %19 = vector.load %arg7[%c0_17, %c0_18, %c0_19] : memref<1x2x32xf32, #tpu.memory_space<vmem>>, vector<1x2x32xf32>
      %20 = vector.shape_cast %19 : vector<1x2x32xf32> to vector<2x32xf32>
      %21 = vector.shape_cast %18 : vector<2x32xf32> to vector<1x2x32xf32>
      tpu.vector_store %arg7[%c0_17, %c0_18, %c0_19], %21 {strides = array<i32>} : memref<1x2x32xf32, #tpu.memory_space<vmem>>, vector<1x2x32xf32>,
    } else {
    }
    return
  }
  func.func @transform_0(%arg0: i32, %arg1: i32, %arg2: i32, %arg3: i32) -> (i32, i32, i32) {
    %c0_i32 = arith.constant 0 : i32
    return %arg0, %arg1, %arg3 : i32, i32, i32
  }
  func.func @transform_1(%arg0: i32, %arg1: i32, %arg2: i32, %arg3: i32) -> (i32, i32, i32) {
    %c0_i32 = arith.constant 0 : i32
    return %arg0, %arg3, %arg2 : i32, i32, i32
  }
  func.func @transform_2(%arg0: i32, %arg1: i32, %arg2: i32, %arg3: i32) -> (i32, i32, i32) {
    %c0_i32 = arith.constant 0 : i32
    %c0_i32_0 = arith.constant 0 : i32
    return %arg0, %c0_i32, %arg2 : i32, i32, i32
  }
  func.func @transform_3(%arg0: i32, %arg1: i32, %arg2: i32, %arg3: i32) -> (i32, i32, i32) {
    %c0_i32 = arith.constant 0 : i32
    return %arg0, %arg1, %arg2 : i32, i32, i32
  }
}

</mosaic_0001>

<llo_original>
// kernel: tpu_custom_call.1
$region0: #{tpu_custom_call.1}
  #allocation0 [shape = 'u32[]', space=smem, size = 0x4, offset = 0x4, fixed_abs, tag = 'smem constant byte address 0x4 - core index']
  #allocation1 [shape = 'u32[144,128]{1,0:T(1,128)}', space=vmem, size = 0x12000, scoped, tag = 'internal scratch']
  #allocation2 [shape = 'f32[2,32]{1,0:T(2,128)}', space=vmem, size = 0x400, scoped, tag = 'scratch operand']
  %s0 = inlined_call_operand.hbm [shape: f32[4,2,32], index: 0, kind: input, shape index: {}]
  %s1 = inlined_call_operand.hbm [shape: f32[4,32,32], index: 1, kind: input, shape index: {}]
  %s2 = inlined_call_operand.hbm [shape: f32[4,1,32], index: 2, kind: input, shape index: {}]
  %s3 = inlined_call_operand.hbm [shape: f32[4,2,32], index: 3, kind: output, shape index: {}]
  %s4 = sld [smem:[#allocation0]]
  $region65: #{tpu_custom_call.1} parent=0
    _
  %s6 = ssub.s32 1, %s4
  %s7 = scalar_select 0, %s6, %s4
  $region1: #{tpu_custom_call.1} parent=0
    #allocation3 [shape = 'u8[2048]{0}', space=vmem, size = 0x800, scoped, tag = 'input window, operand 0']
    #allocation4 [shape = 's32[2]{0}', space=sflag, size = 0x8, scoped, tag = 'scoped memory for tpu_custom_call.1']
    #allocation5 [shape = 's32[2]{0}', space=sflag, size = 0x8, scoped, tag = 'scoped memory for tpu_custom_call.1']
    #allocation6 [shape = 'u8[32768]{0}', space=vmem, size = 0x8000, scoped, tag = 'input window, operand 1']
    #allocation7 [shape = 's32[2]{0}', space=sflag, size = 0x8, scoped, tag = 'scoped memory for tpu_custom_call.1']
    #allocation8 [shape = 'u8[1024]{0}', space=vmem, size = 0x400, scoped, tag = 'input window, operand 2']
    #allocation9 [shape = 'u8[2048]{0}', space=vmem, size = 0x800, scoped, tag = 'output window, operand 0']
    %8 = vsyncpa [#allocation4], 0
    %s9 = scalar_lea.sflag [#allocation4], 1
    %10 = vsyncpa %s9, 0
    %11 = vsyncpa [#allocation7], 0
    %s12 = scalar_lea.sflag [#allocation7], 1
    %13 = vsyncpa %s12, 0
    %14 = vsyncpa [#allocation5], 0
    %s15 = scalar_lea.sflag [#allocation5], 1
    %16 = vsyncpa %s15, 0
    loop: start=0, step=1, limit=6
    $region2: #{tpu_custom_call.1} parent=1 // loop_pre_header
      _
    $region3: #{tpu_custom_call.1} parent=1 // loop_header
      %s18 = sphi 0, %s22
      %p19 = scmp.ge.s32.totalorder %s18, 6
      %s25 = sphi 0, %s51
      %s26 = sphi 0, %s47
      %s27 = sphi 0, %s43
      %s28 = sphi 0, %s39
      %s29 = sphi 0, %s25
      %s30 = sphi 0, %s26
      %s31 = sphi 0, %s27
      %s32 = sphi 0, %s28
      %s33 = sphi 0, %s29
      %s34 = sphi 0, %s30
      %s35 = sphi 0, %s31
      %s36 = sphi 0, %s32
      %s58 = sphi 0, %s60
      %s61 = sphi 0, %s58
      %s62 = sphi 0, %s61
      %s78 = sphi 0, %s62
      %s88 = sphi 0, %s90
      %s91 = sphi 0, %s88
      %s92 = sphi 0, %s91
      %s108 = sphi 0, %s92
      %s116 = sphi 0, %s118
      %s119 = sphi 0, %s116
      %s120 = sphi 0, %s119
      %s136 = sphi 0, %s120
      %s146 = sphi 0, %s148
      %s149 = sphi 0, %s146
      %s150 = sphi 0, %s149
      %s166 = sphi 0, %s150
    $region4: #{tpu_custom_call.1} parent=1 // loop_header_branch
      %21 = sbr.rel (%p19) target = $region8
    $region5: #{tpu_custom_call.1} parent=1 // loop_body
      %s23 = ssub.s32 %s18, 1
      %s24 = ssub.s32 %s18, 2
      %s37 = sadd.s32 1, %s28
      %p38 = scmp.ge.s32.totalorder %s37, 1
      %s39 = scalar_select %p38, 0, %s37
      %s40 = sadd.s32 1, %s27
      %s41 = scalar_select %p38, %s40, %s27
      %p42 = scmp.ge.s32.totalorder %s41, 1
      %s43 = scalar_select %p42, 0, %s41
      %s44 = sadd.s32 1, %s26
      %s45 = scalar_select %p42, %s44, %s26
      %p46 = scmp.ge.s32.totalorder %s45, 1
      %s47 = scalar_select %p46, 0, %s45
      %s48 = sadd.s32 1, %s25
      %s49 = scalar_select %p46, %s48, %s25
      %p50 = scmp.ge.s32.totalorder %s49, 4
      %s51 = scalar_select %p50, 0, %s49
      %s52 = ssub.s32 %s25, %s51
      %s53 = ssub.s32 %s26, %s47
      %s54 = sor.u32 %s52, %s53
      %s55 = ssub.s32 %s28, %s39
      %s56 = sor.u32 %s54, %s55
      %p57 = scmp.eq.s32.totalorder %s56, 0
      %s59 = sadd.s32 %s58, 1
      %s60 = scalar_select %p57, %s58, %s59
      %p63 = pneg %p57
      %p64 = scmp.eq.s32.totalorder %s18, 3
      %p65 = por %p63, %p64
      %p66 = scmp.ne.s32.totalorder %s58, %s61
      %p67 = scmp.eq.s32.totalorder %s18, 0
      %p68 = por %p66, %p67
      %p69 = scmp.ne.s32.totalorder %s58, %s61
      %p70 = scmp.eq.s32.totalorder %s23, 3
      %p71 = por %p69, %p70
      %p72 = scmp.ne.s32.totalorder %s61, %s62
      %p73 = scmp.eq.s32.totalorder %s23, 0
      %p74 = por %p72, %p73
      %p75 = scmp.ne.s32.totalorder %s61, %s62
      %p76 = scmp.eq.s32.totalorder %s24, 3
      %p77 = por %p75, %p76
      %p79 = scmp.ne.s32.totalorder %s62, %s78
      %p80 = scmp.eq.s32.totalorder %s24, 0
      %p81 = por %p79, %p80
      %s82 = ssub.s32 %s25, %s51
      %s83 = ssub.s32 %s28, %s39
      %s84 = sor.u32 %s82, %s83
      %s85 = ssub.s32 %s27, %s43
      %s86 = sor.u32 %s84, %s85
      %p87 = scmp.eq.s32.totalorder %s86, 0
      %s89 = sadd.s32 %s88, 1
      %s90 = scalar_select %p87, %s88, %s89
      %p93 = pneg %p87
      %p94 = scmp.eq.s32.totalorder %s18, 3
      %p95 = por %p93, %p94
      %p96 = scmp.ne.s32.totalorder %s88, %s91
      %p97 = scmp.eq.s32.totalorder %s18, 0
      %p98 = por %p96, %p97
      %p99 = scmp.ne.s32.totalorder %s88, %s91
      %p100 = scmp.eq.s32.totalorder %s23, 3
      %p101 = por %p99, %p100
      %p102 = scmp.ne.s32.totalorder %s91, %s92
      %p103 = scmp.eq.s32.totalorder %s23, 0
      %p104 = por %p102, %p103
      %p105 = scmp.ne.s32.totalorder %s91, %s92
      %p106 = scmp.eq.s32.totalorder %s24, 3
      %p107 = por %p105, %p106
      %p109 = scmp.ne.s32.totalorder %s92, %s108
      %p110 = scmp.eq.s32.totalorder %s24, 0
      %p111 = por %p109, %p110
      %s112 = ssub.s32 %s25, %s51
      %s113 = ssub.s32 %s27, %s43
      %s114 = sor.u32 %s112, %s113
      %p115 = scmp.eq.s32.totalorder %s114, 0
      %s117 = sadd.s32 %s116, 1
      %s118 = scalar_select %p115, %s116, %s117
      %p121 = pneg %p115
      %p122 = scmp.eq.s32.totalorder %s18, 3
      %p123 = por %p121, %p122
      %p124 = scmp.ne.s32.totalorder %s116, %s119
      %p125 = scmp.eq.s32.totalorder %s18, 0
      %p126 = por %p124, %p125
      %p127 = scmp.ne.s32.totalorder %s116, %s119
      %p128 = scmp.eq.s32.totalorder %s23, 3
      %p129 = por %p127, %p128
      %p130 = scmp.ne.s32.totalorder %s119, %s120
      %p131 = scmp.eq.s32.totalorder %s23, 0
      %p132 = por %p130, %p131
      %p133 = scmp.ne.s32.totalorder %s119, %s120
      %p134 = scmp.eq.s32.totalorder %s24, 3
      %p135 = por %p133, %p134
      %p137 = scmp.ne.s32.totalorder %s120, %s136
      %p138 = scmp.eq.s32.totalorder %s24, 0
      %p139 = por %p137, %p138
      %s140 = ssub.s32 %s25, %s51
      %s141 = ssub.s32 %s26, %s47
      %s142 = sor.u32 %s140, %s141
      %s143 = ssub.s32 %s27, %s43
      %s144 = sor.u32 %s142, %s143
      %p145 = scmp.eq.s32.totalorder %s144, 0
      %s147 = sadd.s32 %s146, 1
      %s148 = scalar_select %p145, %s146, %s147
      %p151 = pneg %p145
      %p152 = scmp.eq.s32.totalorder %s18, 3
      %p153 = por %p151, %p152
      %p154 = scmp.ne.s32.totalorder %s146, %s149
      %p155 = scmp.eq.s32.totalorder %s18, 0
      %p156 = por %p154, %p155
      %p157 = scmp.ne.s32.totalorder %s146, %s149
      %p158 = scmp.eq.s32.totalorder %s23, 3
      %p159 = por %p157, %p158
      %p160 = scmp.ne.s32.totalorder %s149, %s150
      %p161 = scmp.eq.s32.totalorder %s23, 0
      %p162 = por %p160, %p161
      %p163 = scmp.ne.s32.totalorder %s149, %s150
      %p164 = scmp.eq.s32.totalorder %s24, 3
      %p165 = por %p163, %p164
      %p167 = scmp.ne.s32.totalorder %s150, %s166
      %p168 = scmp.eq.s32.totalorder %s24, 0
      %p169 = por %p167, %p168
      %p170 = scmp.le.s32.totalorder 1, %s18
      %p171 = scmp.lt.s32.totalorder %s18, 5
      %p172 = pnand %p170, %p171
      %p173 = pneg %p172
      // Predicated region
      $region9: #{tpu_custom_call.1} parent=5 // pred_check
        _
      $region10: #{tpu_custom_call.1} parent=5 // pred_check_branch
        %175 = sbr.rel (%p172) target = $region12
      $region11: #{tpu_custom_call.1} parent=5 // pred_region
        %s176 = ssub.s32 %s18, 1
      $region12: #{tpu_custom_call.1} parent=5 // pred_fallthru
        _
      %p177 = scmp.lt.s32.totalorder %s18, 4
      // Predicated region
      $region13: #{tpu_custom_call.1} parent=5 // pred_check
        %p178 = pneg %p177
      $region14: #{tpu_custom_call.1} parent=5 // pred_check_branch
        %180 = sbr.rel (%p178) target = $region16
      $region15: #{tpu_custom_call.1} parent=5 // pred_region
        // Predicated region
        $region17: #{tpu_custom_call.1} parent=15 // pred_check
          %p181 = pneg %p68
        $region18: #{tpu_custom_call.1} parent=15 // pred_check_branch
          %183 = sbr.rel (%p181) target = $region20
        $region19: #{tpu_custom_call.1} parent=15 // pred_region
          %s184 = sand.u32 %s58, 1
          %s185 = scalar_lea.sflag [#allocation4], %s184
          %s186 = sand.u32 %s58, 1
          %s187 = smul.addr %s186, 2
          %s188 = scalar_lea.vmem [#allocation3], %s187
          %s190 = ssub.s32 32, 32
          %191 = vsyncadd %s185, %s190
          %s192 = sadd.s32 %s28, %s26
          %s193 = sadd.s32 %s192, %s25
          %s194 = smul.addr %s193, 32
          %s195 = scalar_lea.hbm %s0, %s194
          %s197 = sshll.u32 %s188, 4
          %s198 = int_to_ptr.vmem [resolvable:$true] %s197
          %200 = dma.hbm_to_vmem [thread:$0]  %s195, 32, %s198, %s185
        $region20: #{tpu_custom_call.1} parent=15 // pred_fallthru
          _
        // Predicated region
        $region21: #{tpu_custom_call.1} parent=15 // pred_check
          %p201 = pneg %p98
        $region22: #{tpu_custom_call.1} parent=15 // pred_check_branch
          %203 = sbr.rel (%p201) target = $region24
        $region23: #{tpu_custom_call.1} parent=15 // pred_region
          %s204 = sand.u32 %s18, 1
          %s205 = scalar_lea.sflag [#allocation7], %s204
          %s206 = sand.u32 %s88, 1
          %s207 = smul.addr %s206, 32
          %s208 = scalar_lea.vmem [#allocation6], %s207
          %s209 = smul.u32 4, %s28
          %s211 = ssub.s32 512, 512
          %212 = vsyncadd %s205, %s211
          %s213 = sadd.s32 %s27, %s209
          %s214 = smul.addr %s25, 4
          %s215 = sadd.s32 %s213, %s214
          %s216 = smul.addr %s215, 128
          %s217 = scalar_lea.hbm %s1, %s216
          %s218 = sshll.u32 %s208, 4
          %s219 = int_to_ptr.vmem [resolvable:$true] %s218
          %224 = dma.hbm_to_vmem [thread:$0]  %s217, 512, %s219, %s205, 128, 128, 8
        $region24: #{tpu_custom_call.1} parent=15 // pred_fallthru
          _
        // Predicated region
        $region25: #{tpu_custom_call.1} parent=15 // pred_check
          %p225 = pneg %p126
        $region26: #{tpu_custom_call.1} parent=15 // pred_check_branch
          %227 = sbr.rel (%p225) target = $region28
        $region27: #{tpu_custom_call.1} parent=15 // pred_region
          %s228 = sand.u32 %s18, 1
          %s229 = scalar_lea.sflag [#allocation7], %s228
          %s230 = sand.u32 %s116, 1
          %s231 = scalar_lea.vmem [#allocation8], %s230
          %s233 = ssub.s32 16, 16
          %234 = vsyncadd %s229, %s233
          %s235 = sadd.s32 %s27, %s25
          %s236 = smul.addr %s235, 16
          %s237 = scalar_lea.hbm %s2, %s236
          %s239 = sshll.u32 %s231, 4
          %s240 = int_to_ptr.vmem [resolvable:$true] %s239
          %242 = dma.hbm_to_vmem [thread:$0]  %s237, 16, %s240, %s229
        $region28: #{tpu_custom_call.1} parent=15 // pred_fallthru
          _
      $region16: #{tpu_custom_call.1} parent=5 // pred_fallthru
        _
      %p243 = scmp.le.s32.totalorder 1, %s18
      %p244 = scmp.lt.s32.totalorder %s18, 5
      %p245 = pnand %p243, %p244
      %p246 = pneg %p245
      // Predicated region
      $region29: #{tpu_custom_call.1} parent=5 // pred_check
        _
      $region30: #{tpu_custom_call.1} parent=5 // pred_check_branch
        %248 = sbr.rel (%p245) target = $region32
      $region31: #{tpu_custom_call.1} parent=5 // pred_region
        %s249 = ssub.s32 %s18, 1
        %s250 = sand.u32 %s61, 1
        %s251 = scalar_lea.sflag [#allocation4], %s250
        %s252 = sand.u32 %s61, 1
        %s253 = smul.addr %s252, 2
        %s254 = scalar_lea.vmem [#allocation3], %s253
        // Predicated region
        $region33: #{tpu_custom_call.1} parent=31 // pred_check
          %p255 = pneg %p74
        $region34: #{tpu_custom_call.1} parent=31 // pred_check_branch
          %257 = sbr.rel (%p255) target = $region36
        $region35: #{tpu_custom_call.1} parent=31 // pred_region
          %258 = dma.done %s251, 32
        $region36: #{tpu_custom_call.1} parent=31 // pred_fallthru
          _
        %s259 = sand.u32 %s23, 1
        %s260 = scalar_lea.sflag [#allocation7], %s259
        %s261 = sand.u32 %s91, 1
        %s262 = smul.addr %s261, 32
        %s263 = scalar_lea.vmem [#allocation6], %s262
        // Predicated region
        $region37: #{tpu_custom_call.1} parent=31 // pred_check
          %p264 = pneg %p104
        $region38: #{tpu_custom_call.1} parent=31 // pred_check_branch
          %266 = sbr.rel (%p264) target = $region40
        $region39: #{tpu_custom_call.1} parent=31 // pred_region
          %267 = dma.done %s260, 512
        $region40: #{tpu_custom_call.1} parent=31 // pred_fallthru
          _
        %s268 = sand.u32 %s23, 1
        %s269 = scalar_lea.sflag [#allocation7], %s268
        %s270 = sand.u32 %s119, 1
        %s271 = scalar_lea.vmem [#allocation8], %s270
        // Predicated region
        $region41: #{tpu_custom_call.1} parent=31 // pred_check
          %p272 = pneg %p132
        $region42: #{tpu_custom_call.1} parent=31 // pred_check_branch
          %274 = sbr.rel (%p272) target = $region44
        $region43: #{tpu_custom_call.1} parent=31 // pred_region
          %275 = dma.done %s269, 16
        $region44: #{tpu_custom_call.1} parent=31 // pred_fallthru
          _
        %s276 = sand.u32 %s61, 1
        %s277 = scalar_lea.sflag [#allocation4], %s276
        %s278 = sand.u32 %s61, 1
        %s279 = smul.addr %s278, 2
        %s280 = scalar_lea.vmem [#allocation3], %s279
        %p281 = pneg %p74
        %p282 = pneg %p71
        %s283 = sand.u32 %s23, 1
        %s284 = scalar_lea.sflag [#allocation7], %s283
        %s285 = sand.u32 %s91, 1
        %s286 = smul.addr %s285, 32
        %s287 = scalar_lea.vmem [#allocation6], %s286
        %p288 = pneg %p104
        %p289 = pneg %p101
        %s290 = sand.u32 %s23, 1
        %s291 = scalar_lea.sflag [#allocation7], %s290
        %s292 = sand.u32 %s119, 1
        %s293 = scalar_lea.vmem [#allocation8], %s292
        %p294 = pneg %p132
        %p295 = pneg %p129
        %p296 = pneg %p162
        %p297 = pneg %p159
        %s298 = sand.u32 %s149, 1
        %s299 = scalar_lea.sflag [#allocation5], %s298
        %s300 = sand.u32 %s149, 1
        %s301 = smul.addr %s300, 2
        %s302 = scalar_lea.vmem [#allocation9], %s301
        %s303 = smul.u32 4, %s32
        %p304 = scmp.eq.s32.totalorder %s32, 0
        // Predicated region
        $region45: #{tpu_custom_call.1} parent=31 // pred_check
          %p305 = pneg %p304
        $region46: #{tpu_custom_call.1} parent=31 // pred_check_branch
          %307 = sbr.rel (%p305) target = $region48
        $region47: #{tpu_custom_call.1} parent=31 // pred_region
          %vm308 = vcmask 254976
          %309 = vst.msk [vmem:[#allocation2] sm:$0x3] %vm308, 0.0
        $region48: #{tpu_custom_call.1} parent=31 // pred_fallthru
          _
        %v310 = vld [vmem:[#allocation2] sm:$0x3]
        %v311 = vld [vmem:[%s254] sm:$0x3]
        %v312 = vld [vmem:[%s263] sm:$0xff]
        %v313 = vld [vmem:[%s263 + $0x8] sm:$0xff]
        %v314 = vld [vmem:[%s263 + $0x10] sm:$0xff]
        %v315 = vld [vmem:[%s263 + $0x18] sm:$0xff]
        %vm316 = vcmask 261120
        %v318 = vsel %vm316, %v311, 0
        %320 = vmatprep.subr.mxu0 0.0
        %321 = vmatpush1.msra.mxu0 0.0
        %322 = vmatprep.subr.mxu0 0.0
        %323 = vmatpush1.msra.mxu0 0.0
        %324 = vmatprep.subr.mxu0 0.0
        %325 = vmatpush1.msra.mxu0 0.0
        %326 = vmatprep.subr.mxu0 0.0
        %327 = vmatpush1.msra.mxu0 0.0
        %328 = vmatprep.subr.mxu0 0.0
        %329 = vmatpush1.msra.mxu0 0.0
        %330 = vmatprep.subr.mxu0 0.0
        %331 = vmatpush1.msra.mxu0 0.0
        %332 = vmatprep.subr.mxu0 0.0
        %333 = vmatpush1.msra.mxu0 0.0
        %334 = vmatprep.subr.mxu0 0.0
        %335 = vmatpush1.msra.mxu0 0.0
        %336 = vmatprep.subr.mxu0 0.0
        %337 = vmatpush1.msra.mxu0 0.0
        %338 = vmatprep.subr.mxu0 0.0
        %339 = vmatpush1.msra.mxu0 0.0
        %340 = vmatprep.subr.mxu0 0.0
        %341 = vmatpush1.msra.mxu0 0.0
        %342 = vmatprep.subr.mxu0 0.0
        %343 = vmatpush1.msra.mxu0 0.0
        %344 = vmatprep.subr.mxu0 0.0
        %345 = vmatpush1.msra.mxu0 %v315
        %346 = vmatprep.subr.mxu0 0.0
        %347 = vmatpush1.msra.mxu0 %v314
        %348 = vmatprep.subr.mxu0 0.0
        %349 = vmatpush1.msra.mxu0 %v313
        %350 = vmatprep.subr.mxu0 0.0
        %351 = vmatpush1.msra.mxu0 %v312
        %352 = vmatprep.subr.mxu0 0.0
        %353 = vmatpush2.msra.mxu0 0.0
        %354 = vmatprep.subr.mxu0 0.0
        %355 = vmatpush2.msra.mxu0 0.0
        %356 = vmatprep.subr.mxu0 0.0
        %357 = vmatpush2.msra.mxu0 0.0
        %358 = vmatprep.subr.mxu0 0.0
        %359 = vmatpush2.msra.mxu0 0.0
        %360 = vmatprep.subr.mxu0 0.0
        %361 = vmatpush2.msra.mxu0 0.0
        %362 = vmatprep.subr.mxu0 0.0
        %363 = vmatpush2.msra.mxu0 0.0
        %364 = vmatprep.subr.mxu0 0.0
        %365 = vmatpush2.msra.mxu0 0.0
        %366 = vmatprep.subr.mxu0 0.0
        %367 = vmatpush2.msra.mxu0 0.0
        %368 = vmatprep.subr.mxu0 0.0
        %369 = vmatpush2.msra.mxu0 0.0
        %370 = vmatprep.subr.mxu0 0.0
        %371 = vmatpush2.msra.mxu0 0.0
        %372 = vmatprep.subr.mxu0 0.0
        %373 = vmatpush2.msra.mxu0 0.0
        %374 = vmatprep.subr.mxu0 0.0
        %375 = vmatpush2.msra.mxu0 0.0
        %376 = vmatprep.subr.mxu0 0.0
        %377 = vmatpush2.msra.mxu0 0.0
        %378 = vmatprep.subr.mxu0 0.0
        %379 = vmatpush2.msra.mxu0 0.0
        %380 = vmatprep.subr.mxu0 0.0
        %381 = vmatpush2.msra.mxu0 0.0
        %382 = vmatprep.subr.mxu0 0.0
        %383 = vmatpush2.msra.mxu0 0.0
        %384 = vmatprep.mubr.f32.mxu0 0.0
        %385 = vmatmul.mubr.f32.gmra.mxu0 %v318
        %v386 = vpop.f32.mrf.mxu0
        %v387 = vadd.f32 0.0, %v386
        %v388 = vpop.f32.mrf.mxu0
        %389 = vdwg.mxu0
        %v390 = vadd.f32 %v310, %v387
        %vm391 = vcmask 254976
        %392 = vst.msk [vmem:[#allocation2] sm:$0x3] %vm391, %v390
        // Predicated region
        $region49: #{tpu_custom_call.1} parent=31 // pred_check
          %p393 = pneg %p304
        $region50: #{tpu_custom_call.1} parent=31 // pred_check_branch
          %395 = sbr.rel (%p393) target = $region52
        $region51: #{tpu_custom_call.1} parent=31 // pred_region
          %v396 = vld [vmem:[#allocation2] sm:$0x3]
          %v397 = vld [vmem:[%s271] sm:$0x1]
          %v399 = vlaneseq
          %v400 = vshrl.u32 %v399, 7
          %v401 = vsub.s32 0, %v400
          %v402 = vrot.slane %v397, %v401
          %v404 = vadd.f32 %v396, %v402
          %405 = vst.msk [vmem:[%s302] sm:$0x3] %vm391, %v404
        $region52: #{tpu_custom_call.1} parent=31 // pred_fallthru
          _
        %s406 = sand.u32 %s149, 1
        %s407 = scalar_lea.sflag [#allocation5], %s406
        %s408 = sand.u32 %s149, 1
        %s409 = smul.addr %s408, 2
        %s410 = scalar_lea.vmem [#allocation9], %s409
        // Predicated region
        $region53: #{tpu_custom_call.1} parent=31 // pred_check
          %p411 = pneg %p159
        $region54: #{tpu_custom_call.1} parent=31 // pred_check_branch
          %413 = sbr.rel (%p411) target = $region56
        $region55: #{tpu_custom_call.1} parent=31 // pred_region
          %s415 = ssub.s32 32, 32
          %416 = vsyncadd %s407, %s415
          %s417 = sadd.s32 %s31, %s30
          %s418 = sadd.s32 %s417, %s29
          %s419 = smul.addr %s418, 32
          %s420 = scalar_lea.hbm %s3, %s419
          %s422 = sshll.u32 %s410, 4
          %s423 = int_to_ptr.vmem [resolvable:$true] %s422
          %425 = dma.vmem_to_hbm [thread:$0]  %s423, 32, %s420, %s407
        $region56: #{tpu_custom_call.1} parent=31 // pred_fallthru
          _
      $region32: #{tpu_custom_call.1} parent=5 // pred_fallthru
        _
      %p426 = scmp.le.s32.totalorder 2, %s18
      // Predicated region
      $region57: #{tpu_custom_call.1} parent=5 // pred_check
        %p427 = pneg %p426
      $region58: #{tpu_custom_call.1} parent=5 // pred_check_branch
        %429 = sbr.rel (%p427) target = $region60
      $region59: #{tpu_custom_call.1} parent=5 // pred_region
        %s430 = ssub.s32 %s18, 2
        // Predicated region
        $region61: #{tpu_custom_call.1} parent=59 // pred_check
          %p431 = pneg %p165
        $region62: #{tpu_custom_call.1} parent=59 // pred_check_branch
          %433 = sbr.rel (%p431) target = $region64
        $region63: #{tpu_custom_call.1} parent=59 // pred_region
          %s434 = sand.u32 %s150, 1
          %s435 = scalar_lea.sflag [#allocation5], %s434
          %s436 = sand.u32 %s150, 1
          %s437 = smul.addr %s436, 2
          %s438 = scalar_lea.vmem [#allocation9], %s437
          %439 = dma.done %s435, 32
        $region64: #{tpu_custom_call.1} parent=59 // pred_fallthru
          _
      $region60: #{tpu_custom_call.1} parent=5 // pred_fallthru
        _
    $region6: #{tpu_custom_call.1} parent=1 // loop_footer
      %s22 = sadd.s32 1, %s18
    $region7: #{tpu_custom_call.1} parent=1 // loop_footer_branch
      %17 = sbr.rel target = $region3
    $region8: #{tpu_custom_call.1} parent=1 // loop_exit
      _
    %440 = vsyncpa [#allocation4], 1
    %s441 = scalar_lea.sflag [#allocation4], 1
    %442 = vsyncpa %s441, 1
    %443 = vsyncpa [#allocation7], 1
    %s444 = scalar_lea.sflag [#allocation7], 1
    %445 = vsyncpa %s444, 1
    %446 = vsyncpa [#allocation5], 1
    %s447 = scalar_lea.sflag [#allocation5], 1
    %448 = vsyncpa %s447, 1

</llo_original>
